<compile_context>
chip_gen: v7x
topology: tpu7x:2x2x1
jax: 0.10.0
libtpu: 0.0.40
codegen_flags: <defaults>
</compile_context>

<pallas_src>
import functools

import jax
import jax.numpy as jnp
from jax.experimental import pallas as pl
from jax.experimental.pallas import tpu as pltpu

_LANE = 128


def _round_up(n, m):
    return ((n + m - 1) // m) * m


def _block_vmem_bytes(shape, dtype):
    """Rough VMEM bytes for one buffered block, with (8,128) tile rounding."""
    if len(shape) == 1:
        shape = (1,) + tuple(shape)
    lead = 1
    for d in shape[:-2]:
        lead *= d
    r = _round_up(shape[-2], 8)
    c = _round_up(shape[-1], _LANE)
    return lead * r * c * jnp.dtype(dtype).itemsize


def _fused_mlp_kernel(*refs, n_act_layers, compute_dtype):
    """refs = (x, w0, b0, ..., w_{L-1}, b_{L-1}, w_clf, b_clf, out).

    Chains y = sigmoid(y @ W_i + b_i) over the hidden stack, then the final
    un-activated Linear, entirely on VMEM-resident tiles.  Matmul inputs are
    compute_dtype (bf16), accumulation and bias/sigmoid math are f32.
    """
    x_ref = refs[0]
    o_ref = refs[-1]

    y = x_ref[...]
    idx = 1
    for _ in range(n_act_layers):
        w_ref, b_ref = refs[idx], refs[idx + 1]
        idx += 2
        acc = jnp.dot(y, w_ref[...], preferred_element_type=jnp.float32)
        y = jax.nn.sigmoid(acc + b_ref[...]).astype(compute_dtype)
    w_ref, b_ref = refs[idx], refs[idx + 1]            # classifier, no activation
    acc = jnp.dot(y, w_ref[...], preferred_element_type=jnp.float32) + b_ref[...]
    o_ref[...] = acc.astype(o_ref.dtype)


def prepare_params(params, compute_dtype=jnp.bfloat16):
    """One-time conversion of MyNeuralNet params into kernel-ready tensors.

    Weights -> compute_dtype, biases -> f32 row vectors (1, D).  Only the
    FINAL layer's output columns (and its bias) are zero-padded to a multiple
    of 128 so the kernel's output stores are lane-dense; the padded columns
    are exactly 0 and are sliced off by the forward wrapper.
    """
    all_layers = list(params["f"]) + [params["clf"]]
    n_act = len(params["f"])
    dims = tuple([all_layers[0][0].shape[0]] + [w.shape[1] for (w, _) in all_layers])
    out_real = dims[-1]
    out_pad = _round_up(out_real, _LANE)

    flat = []
    for li, (w, b) in enumerate(all_layers):
        w = jnp.asarray(w, compute_dtype)
        b = jnp.asarray(b, jnp.float32)
        if li == len(all_layers) - 1 and out_pad != out_real:
            w = jnp.pad(w, ((0, 0), (0, out_pad - out_real)))
            b = jnp.pad(b, (0, out_pad - out_real))
        flat += [w, b.reshape(1, -1)]

    return {
        "flat": tuple(flat),
        "dims": dims,                 # real feature dims along the chain
        "n_act": n_act,
        "out_pad": out_pad,
        "compute_dtype": compute_dtype,
    }


def my_neural_net_forward(prepared, x, *, batch_tile=256):
    """Fused forward of MyNeuralNet.  x: (B, n_features) -> (B, n_classes)."""
    flat = prepared["flat"]
    dims = prepared["dims"]
    n_act = prepared["n_act"]
    out_pad = prepared["out_pad"]
    cdt = prepared["compute_dtype"]
    n_layers = n_act + 1

    B, Din = x.shape
    assert Din == dims[0], (Din, dims[0])

    # Batch tiling: sublane granularity (16 for bf16), and aim for >=2 grid
    # steps so the "parallel" axis can feed both v7x TensorCores.
    sub = 16 if jnp.dtype(cdt) == jnp.dtype(jnp.bfloat16) else 8
    if B > sub:
        tm = min(batch_tile, _round_up(pl.cdiv(B, 2), sub))
    else:
        tm = sub
    tm = _round_up(max(tm, sub), sub)
    B_pad = _round_up(B, tm)

    # Only the batch axis is padded; feature dims use full-array blocks.
    x_pad = jnp.pad(x.astype(cdt), ((0, B_pad - B), (0, 0)))

    grid = (B_pad // tm,)
    in_specs = [pl.BlockSpec((tm, dims[0]), lambda i: (i, 0))]
    for li in range(n_layers):
        w_in = dims[li]
        w_out = out_pad if li == n_layers - 1 else dims[li + 1]
        # Constant-index resident params: single buffer (no re-fetch per step).
        in_specs.append(pl.BlockSpec((w_in, w_out), lambda i: (0, 0),
                                     pipeline_mode=pl.Buffered(1)))
        in_specs.append(pl.BlockSpec((1, w_out), lambda i: (0, 0),
                                     pipeline_mode=pl.Buffered(1)))
    out_specs = pl.BlockSpec((tm, out_pad), lambda i: (i, 0))

    # VMEM footprint estimate -> explicit scoped limit (guards v7x's 64 MiB).
    est = 0
    for li in range(n_layers):
        w_in = dims[li]
        w_out = out_pad if li == n_layers - 1 else dims[li + 1]
        est += _block_vmem_bytes((w_in, w_out), cdt)          # 1 buffer
        est += _block_vmem_bytes((1, w_out), jnp.float32)     # 1 buffer
    est += 2 * _block_vmem_bytes((tm, dims[0]), cdt)          # x, double-buffered
    est += 2 * _block_vmem_bytes((tm, out_pad), jnp.float32)  # out, double-buffered
    est += 4 * _block_vmem_bytes((tm, max(dims[1:] + (out_pad,))), jnp.float32)  # live acts
    vmem_limit = int(min(max(32 << 20, 2 * est), 60 << 20))

    # Advisory cost hint from REAL (unpadded) dims.
    flops = 2 * B * sum(dims[i] * dims[i + 1] for i in range(n_layers))
    transcendentals = B * sum(dims[i + 1] for i in range(n_act))
    cbytes = jnp.dtype(cdt).itemsize
    bytes_accessed = (B * dims[0] * cbytes + B * dims[-1] * 4
                      + sum(dims[i] * dims[i + 1] * cbytes + dims[i + 1] * 4
                            for i in range(n_layers)))

    kernel = functools.partial(_fused_mlp_kernel,
                               n_act_layers=n_act, compute_dtype=cdt)
    out_padded = pl.pallas_call(
        kernel,
        out_shape=jax.ShapeDtypeStruct((B_pad, out_pad), jnp.float32),
        grid=grid,
        in_specs=in_specs,
        out_specs=out_specs,
        compiler_params=pltpu.CompilerParams(
            dimension_semantics=("parallel",),
            vmem_limit_bytes=vmem_limit),
        cost_estimate=pl.CostEstimate(flops=flops,
                                      transcendentals=transcendentals,
                                      bytes_accessed=bytes_accessed),
    )(x_pad, *flat)

    return out_padded[:B, :dims[-1]]


def init_params(key, layers, n_features, n_classes):
    """Deterministic params matching MyNeuralNet.__init__ shapes.

    Hidden stack: Linear(in, out) for (in, out) in zip([n_features]+layers,
    layers+[n_classes]); classifier: Linear(n_classes, n_classes).
    Weights stored as (in_features, out_features) for x @ W.
    """
    layers_in = [n_features] + list(layers)
    layers_out = list(layers) + [n_classes]
    params = {"f": [], "clf": None}
    for d_in, d_out in zip(layers_in, layers_out):
        key, kw, kb = jax.random.split(key, 3)
        bound = 1.0 / jnp.sqrt(d_in)  # PyTorch nn.Linear default init range
        w = jax.random.uniform(kw, (d_in, d_out), jnp.float32, -bound, bound)
        b = jax.random.uniform(kb, (d_out,), jnp.float32, -bound, bound)
        params["f"].append((w, b))
    key, kw, kb = jax.random.split(key, 3)
    bound = 1.0 / jnp.sqrt(n_classes)
    w = jax.random.uniform(kw, (n_classes, n_classes), jnp.float32, -bound, bound)
    b = jax.random.uniform(kb, (n_classes,), jnp.float32, -bound, bound)
    params["clf"] = (w, b)
    return params


if __name__ == "__main__":
    # Small shapes consistent with the module's forward.
    batch = 8
    n_features = 32
    hidden_layers = [64, 32]
    n_classes = 16

    key = jax.random.PRNGKey(0)
    key, kx, kp = jax.random.split(key, 3)
    x = jax.random.normal(kx, (batch, n_features), jnp.float32)
    params = init_params(kp, hidden_layers, n_features, n_classes)

    prepared = prepare_params(params)          # one-time: cast/pad/reshape params
    out = my_neural_net_forward(prepared, x)   # fused Pallas forward
    out = jax.block_until_ready(out)

    # Pure-JAX f32 reference (same math, no Pallas, no padding).
    y_ref = x
    for w, b in params["f"]:
        y_ref = jax.nn.sigmoid(y_ref @ w + b)
    w, b = params["clf"]
    y_ref = y_ref @ w + b

    assert out.shape == (batch, n_classes)
    max_err = float(jnp.max(jnp.abs(out - y_ref)))
    # bf16 MXU inputs with f32 accumulation -> loosened tolerance.
    assert jnp.allclose(out, y_ref, atol=2e-2, rtol=2e-2), max_err

    print("KERNEL_OK")
</pallas_src>

<mosaic_0001>
module attributes {stable_mosaic.version = 11 : i64} {
  func.func @_fused_mlp_kernel(%arg0: i32, %arg1: memref<16x32xbf16, #tpu.memory_space<vmem>>, %arg2: memref<32x64xbf16, #tpu.memory_space<vmem>>, %arg3: memref<1x64xf32, #tpu.memory_space<vmem>>, %arg4: memref<64x32xbf16, #tpu.memory_space<vmem>>, %arg5: memref<1x32xf32, #tpu.memory_space<vmem>>, %arg6: memref<32x16xbf16, #tpu.memory_space<vmem>>, %arg7: memref<1x16xf32, #tpu.memory_space<vmem>>, %arg8: memref<16x128xbf16, #tpu.memory_space<vmem>>, %arg9: memref<1x128xf32, #tpu.memory_space<vmem>>, %arg10: memref<16x128xf32, #tpu.memory_space<vmem>>) attributes {dimension_semantics = [#tpu.dimension_semantics<parallel>], iteration_bounds = array<i64: 1>, scalar_prefetch = 0 : i64, scratch_operands = 0 : i64, tpu.core_type = #tpu.core_type<tc>, window_params = [{transform_indices = @transform_0, window_bounds = array<i64: 16, 32>}, {pipeline_mode = #tpu.pipeline_mode<synchronous>, transform_indices = @transform_1, window_bounds = array<i64: 32, 64>}, {pipeline_mode = #tpu.pipeline_mode<synchronous>, transform_indices = @transform_2, window_bounds = array<i64: 1, 64>}, {pipeline_mode = #tpu.pipeline_mode<synchronous>, transform_indices = @transform_3, window_bounds = array<i64: 64, 32>}, {pipeline_mode = #tpu.pipeline_mode<synchronous>, transform_indices = @transform_4, window_bounds = array<i64: 1, 32>}, {pipeline_mode = #tpu.pipeline_mode<synchronous>, transform_indices = @transform_5, window_bounds = array<i64: 32, 16>}, {pipeline_mode = #tpu.pipeline_mode<synchronous>, transform_indices = @transform_6, window_bounds = array<i64: 1, 16>}, {pipeline_mode = #tpu.pipeline_mode<synchronous>, transform_indices = @transform_7, window_bounds = array<i64: 16, 128>}, {pipeline_mode = #tpu.pipeline_mode<synchronous>, transform_indices = @transform_8, window_bounds = array<i64: 1, 128>}, {transform_indices = @transform_9, window_bounds = array<i64: 16, 128>}]} {
    %c0 = arith.constant 0 : index
    %c0_0 = arith.constant 0 : index
    %0 = vector.load %arg1[%c0, %c0_0] : memref<16x32xbf16, #tpu.memory_space<vmem>>, vector<16x32xbf16>
    %c0_1 = arith.constant 0 : index
    %c0_2 = arith.constant 0 : index
    %1 = vector.load %arg2[%c0_1, %c0_2] : memref<32x64xbf16, #tpu.memory_space<vmem>>, vector<32x64xbf16>
    %cst = arith.constant dense<0.000000e+00> : vector<16x64xf32>
    %2 = tpu.matmul %0, %1, %cst {dimension_numbers = #tpu.dot_dimension_numbers<[1], [0], [0], [1], [0, 0, 1, 1], [], []>} : vector<16x32xbf16>, vector<32x64xbf16>, vector<16x64xf32> -> vector<16x64xf32>
    %c0_3 = arith.constant 0 : index
    %c0_4 = arith.constant 0 : index
    %3 = vector.load %arg3[%c0_3, %c0_4] : memref<1x64xf32, #tpu.memory_space<vmem>>, vector<1x64xf32>
    %4 = vector.broadcast %3 : vector<1x64xf32> to vector<16x64xf32>
    %5 = arith.addf %2, %4 : vector<16x64xf32>
    %6 = arith.negf %5 : vector<16x64xf32>
    %7 = math.exp %6 : vector<16x64xf32>
    %cst_5 = arith.constant 1.000000e+00 : f32
    %8 = vector.broadcast %cst_5 : f32 to vector<16x64xf32>
    %9 = arith.addf %8, %7 : vector<16x64xf32>
    %10 = arith.divf %8, %9 : vector<16x64xf32>
    %11 = arith.truncf %10 : vector<16x64xf32> to vector<16x64xbf16>
    %c0_6 = arith.constant 0 : index
    %c0_7 = arith.constant 0 : index
    %12 = vector.load %arg4[%c0_6, %c0_7] : memref<64x32xbf16, #tpu.memory_space<vmem>>, vector<64x32xbf16>
    %cst_8 = arith.constant dense<0.000000e+00> : vector<16x32xf32>
    %13 = tpu.matmul %11, %12, %cst_8 {dimension_numbers = #tpu.dot_dimension_numbers<[1], [0], [0], [1], [0, 0, 1, 1], [], []>} : vector<16x64xbf16>, vector<64x32xbf16>, vector<16x32xf32> -> vector<16x32xf32>
    %c0_9 = arith.constant 0 : index
    %c0_10 = arith.constant 0 : index
    %14 = vector.load %arg5[%c0_9, %c0_10] : memref<1x32xf32, #tpu.memory_space<vmem>>, vector<1x32xf32>
    %15 = vector.broadcast %14 : vector<1x32xf32> to vector<16x32xf32>
    %16 = arith.addf %13, %15 : vector<16x32xf32>
    %17 = arith.negf %16 : vector<16x32xf32>
    %18 = math.exp %17 : vector<16x32xf32>
    %cst_11 = arith.constant 1.000000e+00 : f32
    %19 = vector.broadcast %cst_11 : f32 to vector<16x32xf32>
    %20 = arith.addf %19, %18 : vector<16x32xf32>
    %21 = arith.divf %19, %20 : vector<16x32xf32>
    %22 = arith.truncf %21 : vector<16x32xf32> to vector<16x32xbf16>
    %c0_12 = arith.constant 0 : index
    %c0_13 = arith.constant 0 : index
    %23 = vector.load %arg6[%c0_12, %c0_13] : memref<32x16xbf16, #tpu.memory_space<vmem>>, vector<32x16xbf16>
    %cst_14 = arith.constant dense<0.000000e+00> : vector<16x16xf32>
    %24 = tpu.matmul %22, %23, %cst_14 {dimension_numbers = #tpu.dot_dimension_numbers<[1], [0], [0], [1], [0, 0, 1, 1], [], []>} : vector<16x32xbf16>, vector<32x16xbf16>, vector<16x16xf32> -> vector<16x16xf32>
    %c0_15 = arith.constant 0 : index
    %c0_16 = arith.constant 0 : index
    %25 = vector.load %arg7[%c0_15, %c0_16] : memref<1x16xf32, #tpu.memory_space<vmem>>, vector<1x16xf32>
    %26 = vector.broadcast %25 : vector<1x16xf32> to vector<16x16xf32>
    %27 = arith.addf %24, %26 : vector<16x16xf32>
    %28 = arith.negf %27 : vector<16x16xf32>
    %29 = math.exp %28 : vector<16x16xf32>
    %cst_17 = arith.constant 1.000000e+00 : f32
    %30 = vector.broadcast %cst_17 : f32 to vector<16x16xf32>
    %31 = arith.addf %30, %29 : vector<16x16xf32>
    %32 = arith.divf %30, %31 : vector<16x16xf32>
    %33 = arith.truncf %32 : vector<16x16xf32> to vector<16x16xbf16>
    %c0_18 = arith.constant 0 : index
    %c0_19 = arith.constant 0 : index
    %34 = vector.load %arg8[%c0_18, %c0_19] : memref<16x128xbf16, #tpu.memory_space<vmem>>, vector<16x128xbf16>
    %cst_20 = arith.constant dense<0.000000e+00> : vector<16x128xf32>
    %35 = tpu.matmul %33, %34, %cst_20 {dimension_numbers = #tpu.dot_dimension_numbers<[1], [0], [0], [1], [0, 0, 1, 1], [], []>} : vector<16x16xbf16>, vector<16x128xbf16>, vector<16x128xf32> -> vector<16x128xf32>
    %c0_21 = arith.constant 0 : index
    %c0_22 = arith.constant 0 : index
    %36 = vector.load %arg9[%c0_21, %c0_22] : memref<1x128xf32, #tpu.memory_space<vmem>>, vector<1x128xf32>
    %37 = vector.broadcast %36 : vector<1x128xf32> to vector<16x128xf32>
    %38 = arith.addf %35, %37 : vector<16x128xf32>
    %c0_23 = arith.constant 0 : index
    %c0_24 = arith.constant 0 : index
    %39 = vector.load %arg10[%c0_23, %c0_24] : memref<16x128xf32, #tpu.memory_space<vmem>>, vector<16x128xf32>
    tpu.vector_store %arg10[%c0_23, %c0_24], %38 {strides = array<i32>} : memref<16x128xf32, #tpu.memory_space<vmem>>, vector<16x128xf32>,
    return
  }
  func.func @transform_0(%arg0: i32) -> (i32, i32) {
    %c0_i32 = arith.constant 0 : i32
    %c0_i32_0 = arith.constant 0 : i32
    return %arg0, %c0_i32 : i32, i32
  }
  func.func @transform_1(%arg0: i32) -> (i32, i32) {
    %c0_i32 = arith.constant 0 : i32
    %c0_i32_0 = arith.constant 0 : i32
    %c0_i32_1 = arith.constant 0 : i32
    return %c0_i32, %c0_i32_0 : i32, i32
  }
  func.func @transform_2(%arg0: i32) -> (i32, i32) {
    %c0_i32 = arith.constant 0 : i32
    %c0_i32_0 = arith.constant 0 : i32
    %c0_i32_1 = arith.constant 0 : i32
    return %c0_i32, %c0_i32_0 : i32, i32
  }
  func.func @transform_3(%arg0: i32) -> (i32, i32) {
    %c0_i32 = arith.constant 0 : i32
    %c0_i32_0 = arith.constant 0 : i32
    %c0_i32_1 = arith.constant 0 : i32
    return %c0_i32, %c0_i32_0 : i32, i32
  }
  func.func @transform_4(%arg0: i32) -> (i32, i32) {
    %c0_i32 = arith.constant 0 : i32
    %c0_i32_0 = arith.constant 0 : i32
    %c0_i32_1 = arith.constant 0 : i32
    return %c0_i32, %c0_i32_0 : i32, i32
  }
  func.func @transform_5(%arg0: i32) -> (i32, i32) {
    %c0_i32 = arith.constant 0 : i32
    %c0_i32_0 = arith.constant 0 : i32
    %c0_i32_1 = arith.constant 0 : i32
    return %c0_i32, %c0_i32_0 : i32, i32
  }
  func.func @transform_6(%arg0: i32) -> (i32, i32) {
    %c0_i32 = arith.constant 0 : i32
    %c0_i32_0 = arith.constant 0 : i32
    %c0_i32_1 = arith.constant 0 : i32
    return %c0_i32, %c0_i32_0 : i32, i32
  }
  func.func @transform_7(%arg0: i32) -> (i32, i32) {
    %c0_i32 = arith.constant 0 : i32
    %c0_i32_0 = arith.constant 0 : i32
    %c0_i32_1 = arith.constant 0 : i32
    return %c0_i32, %c0_i32_0 : i32, i32
  }
  func.func @transform_8(%arg0: i32) -> (i32, i32) {
    %c0_i32 = arith.constant 0 : i32
    %c0_i32_0 = arith.constant 0 : i32
    %c0_i32_1 = arith.constant 0 : i32
    return %c0_i32, %c0_i32_0 : i32, i32
  }
  func.func @transform_9(%arg0: i32) -> (i32, i32) {
    %c0_i32 = arith.constant 0 : i32
    %c0_i32_0 = arith.constant 0 : i32
    return %arg0, %c0_i32 : i32, i32
  }
}

</mosaic_0001>

<llo_original>
// kernel: tpu_custom_call.1
$region0: #{tpu_custom_call.1}
  #allocation0 [shape = 'u32[]', space=smem, size = 0x4, offset = 0x4, fixed_abs, tag = 'smem constant byte address 0x4 - core index']
  #allocation1 [shape = 'u32[144,128]{1,0:T(1,128)}', space=vmem, size = 0x12000, scoped, tag = 'internal scratch']
  %s0 = inlined_call_operand.vmem [shape: bf16[16,32], index: 0, kind: input, shape index: {}]
  %s1 = inlined_call_operand.vmem [shape: bf16[32,64], index: 1, kind: input, shape index: {}]
  %s2 = inlined_call_operand.vmem [shape: f32[1,64], index: 2, kind: input, shape index: {}]
  %s3 = inlined_call_operand.vmem [shape: bf16[64,32], index: 3, kind: input, shape index: {}]
  %s4 = inlined_call_operand.vmem [shape: f32[1,32], index: 4, kind: input, shape index: {}]
  %s5 = inlined_call_operand.vmem [shape: bf16[32,16], index: 5, kind: input, shape index: {}]
  %s6 = inlined_call_operand.vmem [shape: f32[1,16], index: 6, kind: input, shape index: {}]
  %s7 = inlined_call_operand.vmem [shape: bf16[16,128], index: 7, kind: input, shape index: {}]
  %s8 = inlined_call_operand.vmem [shape: f32[1,128], index: 8, kind: input, shape index: {}]
  %s9 = inlined_call_operand.hbm [shape: f32[16,128], index: 9, kind: output, shape index: {}]
  %s10 = sld [smem:[#allocation0]]
  $region46: #{tpu_custom_call.1} parent=0
    _
  %s12 = ssub.s32 1, %s10
  %s13 = scalar_select 0, %s12, %s10
  $region1: #{tpu_custom_call.1} parent=0
    #allocation2 [shape = 'u8[8192]{0}', space=vmem, size = 0x2000, scoped, tag = 'output window, operand 0, single buffered']
    #allocation3 [shape = 's32[1]{0}', space=sflag, size = 0x4, scoped, tag = 'scoped memory for tpu_custom_call.1']
    %14 = vsyncpa [#allocation3], 0
    // Predicated region
    $region2: #{tpu_custom_call.1} parent=1 // pred_check
      _
    $region3: #{tpu_custom_call.1} parent=1 // pred_check_branch
      %16 = sbr.rel (0) target = $region5
    $region4: #{tpu_custom_call.1} parent=1 // pred_region
      _
    $region5: #{tpu_custom_call.1} parent=1 // pred_fallthru
      _
    // Predicated region
    $region6: #{tpu_custom_call.1} parent=1 // pred_check
      _
    $region7: #{tpu_custom_call.1} parent=1 // pred_check_branch
      %18 = sbr.rel (0) target = $region9
    $region8: #{tpu_custom_call.1} parent=1 // pred_region
      _
    $region9: #{tpu_custom_call.1} parent=1 // pred_fallthru
      _
    // Predicated region
    $region10: #{tpu_custom_call.1} parent=1 // pred_check
      _
    $region11: #{tpu_custom_call.1} parent=1 // pred_check_branch
      %20 = sbr.rel (0) target = $region13
    $region12: #{tpu_custom_call.1} parent=1 // pred_region
      _
    $region13: #{tpu_custom_call.1} parent=1 // pred_fallthru
      _
    // Predicated region
    $region14: #{tpu_custom_call.1} parent=1 // pred_check
      _
    $region15: #{tpu_custom_call.1} parent=1 // pred_check_branch
      %22 = sbr.rel (0) target = $region17
    $region16: #{tpu_custom_call.1} parent=1 // pred_region
      _
    $region17: #{tpu_custom_call.1} parent=1 // pred_fallthru
      _
    // Predicated region
    $region18: #{tpu_custom_call.1} parent=1 // pred_check
      _
    $region19: #{tpu_custom_call.1} parent=1 // pred_check_branch
      %24 = sbr.rel (0) target = $region21
    $region20: #{tpu_custom_call.1} parent=1 // pred_region
      _
    $region21: #{tpu_custom_call.1} parent=1 // pred_fallthru
      _
    // Predicated region
    $region22: #{tpu_custom_call.1} parent=1 // pred_check
      _
    $region23: #{tpu_custom_call.1} parent=1 // pred_check_branch
      %26 = sbr.rel (0) target = $region25
    $region24: #{tpu_custom_call.1} parent=1 // pred_region
      _
    $region25: #{tpu_custom_call.1} parent=1 // pred_fallthru
      _
    // Predicated region
    $region26: #{tpu_custom_call.1} parent=1 // pred_check
      _
    $region27: #{tpu_custom_call.1} parent=1 // pred_check_branch
      %28 = sbr.rel (0) target = $region29
    $region28: #{tpu_custom_call.1} parent=1 // pred_region
      _
    $region29: #{tpu_custom_call.1} parent=1 // pred_fallthru
      _
    // Predicated region
    $region30: #{tpu_custom_call.1} parent=1 // pred_check
      _
    $region31: #{tpu_custom_call.1} parent=1 // pred_check_branch
      %30 = sbr.rel (0) target = $region33
    $region32: #{tpu_custom_call.1} parent=1 // pred_region
      _
    $region33: #{tpu_custom_call.1} parent=1 // pred_fallthru
      _
    // Predicated region
    $region34: #{tpu_custom_call.1} parent=1 // pred_check
      _
    $region35: #{tpu_custom_call.1} parent=1 // pred_check_branch
      %32 = sbr.rel (0) target = $region37
    $region36: #{tpu_custom_call.1} parent=1 // pred_region
      _
    $region37: #{tpu_custom_call.1} parent=1 // pred_fallthru
      _
    %v34 = vld [vmem:[%s0] sm:$0xf]
    %v35 = vld [vmem:[%s0 + $0x4] sm:$0xf]
    %v36 = vld [vmem:[%s1] sm:$0xf]
    %v37 = vld [vmem:[%s1 + $0x4] sm:$0xf]
    %v38 = vld [vmem:[%s1 + $0x8] sm:$0xf]
    %v39 = vld [vmem:[%s1 + $0xc] sm:$0xf]
    %v40 = vld [vmem:[%s2] sm:$0x1]
    %v42 = vlaneseq
    %v43 = vshrl.u32 %v42, 7
    %v44 = vsub.s32 0, %v43
    %v45 = vrot.slane %v40, %v44
    %v49 = vunpack.c.l.b16 %v34
    %v50 = vunpack.c.l.b16 %v35
    %v51 = vpack.c.b16 %v50, %v49
    %v56 = vunpack.c.l.b16 %v36
    %v57 = vunpack.c.l.b16 %v37
    %v58 = vunpack.c.l.b16 %v38
    %v59 = vunpack.c.l.b16 %v39
    %v60 = vpack.c.b16 %v57, %v56
    %v61 = vpack.c.b16 %v59, %v58
    %vm64 = vcmask 261120
    %v66 = vsel %vm64, %v51, 0
    %68 = vmatprep.subr.bf16.mxu0 0
    %69 = vmatpush1.bf16.msra.mxu0 %v60
    %70 = vmatprep.subr.bf16.mxu0 0
    %71 = vmatpush1.bf16.msra.mxu0 %v61
    %72 = vmatprep.subr.bf16.mxu0 0
    %73 = vmatpush1.bf16.msra.mxu0 0
    %74 = vmatprep.subr.bf16.mxu0 0
    %75 = vmatpush1.bf16.msra.mxu0 0
    %76 = vmatprep.subr.bf16.mxu0 0
    %77 = vmatpush1.bf16.msra.mxu0 0
    %78 = vmatprep.subr.bf16.mxu0 0
    %79 = vmatpush1.bf16.msra.mxu0 0
    %80 = vmatprep.subr.bf16.mxu0 0
    %81 = vmatpush1.bf16.msra.mxu0 0
    %82 = vmatprep.subr.bf16.mxu0 0
    %83 = vmatpush1.bf16.msra.mxu0 0
    %84 = vmatprep.subr.bf16.mxu0 0
    %85 = vmatpush1.bf16.msra.mxu0 0
    %86 = vmatprep.subr.bf16.mxu0 0
    %87 = vmatpush1.bf16.msra.mxu0 0
    %88 = vmatprep.subr.bf16.mxu0 0
    %89 = vmatpush1.bf16.msra.mxu0 0
    %90 = vmatprep.subr.bf16.mxu0 0
    %91 = vmatpush1.bf16.msra.mxu0 0
    %92 = vmatprep.subr.bf16.mxu0 0
    %93 = vmatpush1.bf16.msra.mxu0 0
    %94 = vmatprep.subr.bf16.mxu0 0
    %95 = vmatpush1.bf16.msra.mxu0 0
    %96 = vmatprep.subr.bf16.mxu0 0
    %97 = vmatpush1.bf16.msra.mxu0 0
    %98 = vmatprep.subr.bf16.mxu0 0
    %99 = vmatpush1.bf16.msra.mxu0 0
    %100 = vmatprep.mubr.bf16.mxu0 0
    %101 = vmatmul.mubr.bf16.gmra.mrb[0].mxu0 %v66
    %v102 = vpop.f32.mrb[0].mxu0
    %v103 = vadd.f32 %v45, %v102
    %v104 = vpop.f32.mrb[0].mxu0
    %v105 = vpop.f32.mrb[0].mxu0
    %v106 = vadd.f32 %v45, %v105
    %v107 = vpop.f32.mrb[0].mxu0
    %108 = vdwg.mxu0
    %v109 = vxor.u32 %v103, 2147483648
    %v110 = vxor.u32 %v106, 2147483648
    %v111 = vmul.f32 %v109, 1.442695
    %v112 = vpow.pop %v111
    %v113 = vmul.f32 %v110, 1.442695
    %v114 = vpow.pop %v113
    %v115 = vadd.f32 %v112, 1.0
    %v116 = vadd.f32 %v114, 1.0
    %v117 = vrcp.pop %v115
    %v118 = vmul.f32 1.0, %v117
    %v119 = vrcp.pop %v116
    %v120 = vmul.f32 1.0, %v119
    %v121 = vpack.c.bf16 %v120, %v118
    %v122 = vld [vmem:[%s3] sm:$0xf]
    %v123 = vld [vmem:[%s3 + $0x4] sm:$0xf]
    %v124 = vld [vmem:[%s3 + $0x8] sm:$0xf]
    %v125 = vld [vmem:[%s3 + $0xc] sm:$0xf]
    %v126 = vld [vmem:[%s3 + $0x10] sm:$0xf]
    %v127 = vld [vmem:[%s3 + $0x14] sm:$0xf]
    %v128 = vld [vmem:[%s3 + $0x18] sm:$0xf]
    %v129 = vld [vmem:[%s3 + $0x1c] sm:$0xf]
    %v130 = vld [vmem:[%s4] sm:$0x1]
    %v132 = vlaneseq
    %v133 = vshrl.u32 %v132, 7
    %v134 = vsub.s32 0, %v133
    %v135 = vrot.slane %v130, %v134
    %v145 = vunpack.c.l.b16 %v122
    %v146 = vunpack.c.l.b16 %v123
    %v147 = vunpack.c.l.b16 %v124
    %v148 = vunpack.c.l.b16 %v125
    %v149 = vunpack.c.l.b16 %v126
    %v150 = vunpack.c.l.b16 %v127
    %v151 = vunpack.c.l.b16 %v128
    %v152 = vunpack.c.l.b16 %v129
    %v153 = vpack.c.b16 %v146, %v145
    %v154 = vpack.c.b16 %v148, %v147
    %v155 = vpack.c.b16 %v150, %v149
    %v156 = vpack.c.b16 %v152, %v151
    %vm161 = vcmask 523264
    %v163 = vsel %vm161, %v121, 0
    %165 = vmatprep.subr.bf16.mxu0 0
    %166 = vmatpush1.bf16.msra.mxu0 %v153
    %167 = vmatprep.subr.bf16.mxu0 0
    %168 = vmatpush1.bf16.msra.mxu0 %v154
    %169 = vmatprep.subr.bf16.mxu0 0
    %170 = vmatpush1.bf16.msra.mxu0 %v155
    %171 = vmatprep.subr.bf16.mxu0 0
    %172 = vmatpush1.bf16.msra.mxu0 %v156
    %173 = vmatprep.subr.bf16.mxu0 0
    %174 = vmatpush1.bf16.msra.mxu0 0
    %175 = vmatprep.subr.bf16.mxu0 0
    %176 = vmatpush1.bf16.msra.mxu0 0
    %177 = vmatprep.subr.bf16.mxu0 0
    %178 = vmatpush1.bf16.msra.mxu0 0
    %179 = vmatprep.subr.bf16.mxu0 0
    %180 = vmatpush1.bf16.msra.mxu0 0
    %181 = vmatprep.subr.bf16.mxu0 0
    %182 = vmatpush1.bf16.msra.mxu0 0
    %183 = vmatprep.subr.bf16.mxu0 0
    %184 = vmatpush1.bf16.msra.mxu0 0
    %185 = vmatprep.subr.bf16.mxu0 0
    %186 = vmatpush1.bf16.msra.mxu0 0
    %187 = vmatprep.subr.bf16.mxu0 0
    %188 = vmatpush1.bf16.msra.mxu0 0
    %189 = vmatprep.subr.bf16.mxu0 0
    %190 = vmatpush1.bf16.msra.mxu0 0
    %191 = vmatprep.subr.bf16.mxu0 0
    %192 = vmatpush1.bf16.msra.mxu0 0
    %193 = vmatprep.subr.bf16.mxu0 0
    %194 = vmatpush1.bf16.msra.mxu0 0
    %195 = vmatprep.subr.bf16.mxu0 0
    %196 = vmatpush1.bf16.msra.mxu0 0
    %197 = vmatprep.mubr.bf16.mxu0 0
    %198 = vmatmul.mubr.bf16.gmra.mrb[0].mxu0 %v163
    %v199 = vpop.f32.mrb[0].mxu0
    %v200 = vadd.f32 %v135, %v199
    %v201 = vpop.f32.mrb[0].mxu0
    %v202 = vpop.f32.mrb[0].mxu0
    %v203 = vadd.f32 %v135, %v202
    %v204 = vpop.f32.mrb[0].mxu0
    %205 = vdwg.mxu0
    %v206 = vxor.u32 %v200, 2147483648
    %v207 = vxor.u32 %v203, 2147483648
    %v208 = vmul.f32 %v206, 1.442695
    %v209 = vpow.pop %v208
    %v210 = vmul.f32 %v207, 1.442695
    %v211 = vpow.pop %v210
    %v212 = vadd.f32 %v209, 1.0
    %v213 = vadd.f32 %v211, 1.0
    %v214 = vrcp.pop %v212
    %v215 = vmul.f32 1.0, %v214
    %v216 = vrcp.pop %v213
    %v217 = vmul.f32 1.0, %v216
    %v218 = vpack.c.bf16 %v217, %v215
    %v219 = vld [vmem:[%s5] sm:$0xf]
    %v220 = vld [vmem:[%s5 + $0x4] sm:$0xf]
    %v221 = vld [vmem:[%s5 + $0x8] sm:$0xf]
    %v222 = vld [vmem:[%s5 + $0xc] sm:$0xf]
    %v223 = vld [vmem:[%s6] sm:$0x1]
    %v225 = vlaneseq
    %v226 = vshrl.u32 %v225, 7
    %v227 = vsub.s32 0, %v226
    %v228 = vrot.slane %v223, %v227
    %v234 = vunpack.c.l.b16 %v219
    %v235 = vunpack.c.l.b16 %v220
    %v236 = vunpack.c.l.b16 %v221
    %v237 = vunpack.c.l.b16 %v222
    %v238 = vpack.c.b16 %v235, %v234
    %v239 = vpack.c.b16 %v237, %v236
    %v243 = vsel %vm64, %v218, 0
    %245 = vmatprep.subr.bf16.mxu0 0
    %246 = vmatpush1.bf16.msra.mxu0 %v238
    %247 = vmatprep.subr.bf16.mxu0 0
    %248 = vmatpush1.bf16.msra.mxu0 %v239
    %249 = vmatprep.subr.bf16.mxu0 0
    %250 = vmatpush1.bf16.msra.mxu0 0
    %251 = vmatprep.subr.bf16.mxu0 0
    %252 = vmatpush1.bf16.msra.mxu0 0
    %253 = vmatprep.subr.bf16.mxu0 0
    %254 = vmatpush1.bf16.msra.mxu0 0
    %255 = vmatprep.subr.bf16.mxu0 0
    %256 = vmatpush1.bf16.msra.mxu0 0
    %257 = vmatprep.subr.bf16.mxu0 0
    %258 = vmatpush1.bf16.msra.mxu0 0
    %259 = vmatprep.subr.bf16.mxu0 0
    %260 = vmatpush1.bf16.msra.mxu0 0
    %261 = vmatprep.subr.bf16.mxu0 0
    %262 = vmatpush1.bf16.msra.mxu0 0
    %263 = vmatprep.subr.bf16.mxu0 0
    %264 = vmatpush1.bf16.msra.mxu0 0
    %265 = vmatprep.subr.bf16.mxu0 0
    %266 = vmatpush1.bf16.msra.mxu0 0
    %267 = vmatprep.subr.bf16.mxu0 0
    %268 = vmatpush1.bf16.msra.mxu0 0
    %269 = vmatprep.subr.bf16.mxu0 0
    %270 = vmatpush1.bf16.msra.mxu0 0
    %271 = vmatprep.subr.bf16.mxu0 0
    %272 = vmatpush1.bf16.msra.mxu0 0
    %273 = vmatprep.subr.bf16.mxu0 0
    %274 = vmatpush1.bf16.msra.mxu0 0
    %275 = vmatprep.subr.bf16.mxu0 0
    %276 = vmatpush1.bf16.msra.mxu0 0
    %277 = vmatprep.mubr.bf16.mxu0 0
    %278 = vmatmul.mubr.bf16.gmra.mrb[0].mxu0 %v243
    %v279 = vpop.f32.mrb[0].mxu0
    %v280 = vadd.f32 %v228, %v279
    %v281 = vpop.f32.mrb[0].mxu0
    %v282 = vpop.f32.mrb[0].mxu0
    %v283 = vadd.f32 %v228, %v282
    %v284 = vpop.f32.mrb[0].mxu0
    %285 = vdwg.mxu0
    %v286 = vxor.u32 %v280, 2147483648
    %v287 = vxor.u32 %v283, 2147483648
    %v288 = vmul.f32 %v286, 1.442695
    %v289 = vpow.pop %v288
    %v290 = vmul.f32 %v287, 1.442695
    %v291 = vpow.pop %v290
    %v292 = vadd.f32 %v289, 1.0
    %v293 = vadd.f32 %v291, 1.0
    %v294 = vrcp.pop %v292
    %v295 = vmul.f32 1.0, %v294
    %v296 = vrcp.pop %v293
    %v297 = vmul.f32 1.0, %v296
    %v298 = vpack.c.bf16 %v297, %v295
    %v299 = vld [vmem:[%s7] sm:$0xf]
    %v300 = vld [vmem:[%s7 + $0x4] sm:$0xf]
    %v301 = vld [vmem:[%s8] sm:$0x1]
    %v303 = vlaneseq
    %v304 = vshrl.u32 %v303, 7
    %v305 = vsub.s32 0, %v304
    %v306 = vrot.slane %v301, %v305
    %v310 = vunpack.c.l.b16 %v299
    %v311 = vunpack.c.l.b16 %v300
    %v312 = vpack.c.b16 %v311, %v310
    %vm314 = vcmask 130048
    %v316 = vsel %vm314, %v298, 0
    %318 = vmatprep.subr.bf16.mxu0 0
    %319 = vmatpush1.bf16.msra.mxu0 %v312
    %320 = vmatprep.subr.bf16.mxu0 0
    %321 = vmatpush1.bf16.msra.mxu0 0
    %322 = vmatprep.subr.bf16.mxu0 0
    %323 = vmatpush1.bf16.msra.mxu0 0
    %324 = vmatprep.subr.bf16.mxu0 0
    %325 = vmatpush1.bf16.msra.mxu0 0
    %326 = vmatprep.subr.bf16.mxu0 0
    %327 = vmatpush1.bf16.msra.mxu0 0
    %328 = vmatprep.subr.bf16.mxu0 0
    %329 = vmatpush1.bf16.msra.mxu0 0
    %330 = vmatprep.subr.bf16.mxu0 0
    %331 = vmatpush1.bf16.msra.mxu0 0
    %332 = vmatprep.subr.bf16.mxu0 0
    %333 = vmatpush1.bf16.msra.mxu0 0
    %334 = vmatprep.subr.bf16.mxu0 0
    %335 = vmatpush1.bf16.msra.mxu0 0
    %336 = vmatprep.subr.bf16.mxu0 0
    %337 = vmatpush1.bf16.msra.mxu0 0
    %338 = vmatprep.subr.bf16.mxu0 0
    %339 = vmatpush1.bf16.msra.mxu0 0
    %340 = vmatprep.subr.bf16.mxu0 0
    %341 = vmatpush1.bf16.msra.mxu0 0
    %342 = vmatprep.subr.bf16.mxu0 0
    %343 = vmatpush1.bf16.msra.mxu0 0
    %344 = vmatprep.subr.bf16.mxu0 0
    %345 = vmatpush1.bf16.msra.mxu0 0
    %346 = vmatprep.subr.bf16.mxu0 0
    %347 = vmatpush1.bf16.msra.mxu0 0
    %348 = vmatprep.subr.bf16.mxu0 0
    %349 = vmatpush1.bf16.msra.mxu0 0
    %350 = vmatprep.mubr.bf16.mxu0 0
    %351 = vmatmul.mubr.bf16.gmra.mrb[0].mxu0 %v316
    %v352 = vpop.f32.mrb[0].mxu0
    %v353 = vadd.f32 %v306, %v352
    %v354 = vpop.f32.mrb[0].mxu0
    %v355 = vpop.f32.mrb[0].mxu0
    %v356 = vadd.f32 %v306, %v355
    %v357 = vpop.f32.mrb[0].mxu0
    %358 = vdwg.mxu0
    %359 = vst [vmem:[#allocation2] sm:$0xff] %v353
    %360 = vst [vmem:[#allocation2 + $0x8] sm:$0xff] %v356
    // Predicated region
    $region38: #{tpu_custom_call.1} parent=1 // pred_check
      _
    $region39: #{tpu_custom_call.1} parent=1 // pred_check_branch
      %362 = sbr.rel (0) target = $region41
    $region40: #{tpu_custom_call.1} parent=1 // pred_region
      %s364 = ssub.s32 256, 256
      %365 = vsyncadd [#allocation3], %s364
      %s366 = sshll.u32 [#allocation2], 4
      %s367 = int_to_ptr.vmem [resolvable:$true] %s366
      %372 = dma.vmem_to_hbm [thread:$0]  %s367, 256, %s9, [#allocation3], 128, 128, 8
    $region41: #{tpu_custom_call.1} parent=1 // pred_fallthru
      _
    // Predicated region
    $region42: #{tpu_custom_call.1} parent=1 // pred_check
      _
    $region43: #{tpu_custom_call.1} parent=1 // pred_check_branch
      %374 = sbr.rel (0) target = $region45
    $region44: #{tpu_custom_call.1} parent=1 // pred_region
      %375 = dma.done [#allocation3], 256
    $region45: #{tpu_custom_call.1} parent=1 // pred_fallthru
      _
    %376 = vsyncpa [#allocation3], 1

</llo_original>
